<compile_context>
chip_gen: v7x
topology: tpu7x:2x2x1
jax: 0.10.0
libtpu: 0.0.40
codegen_flags: <defaults>
</compile_context>

<pallas_src>
import functools
import math

import jax
import jax.numpy as jnp
from jax.experimental import pallas as pl
from jax.experimental.pallas import tpu as pltpu


_VMEM_LIMIT_BYTES = 64 * 1024 * 1024   # above the 16/32 MiB scoped defaults, fits all gens


def _pick_tile(dim, target, align):
    """Largest `align`-aligned tile <= target that divides `dim`.

    Falls back to the full dim (a full-extent block is always legal w.r.t. the
    (8, 128) block rule)."""
    if dim <= target:
        return dim
    t = (target // align) * align
    while t >= align:
        if dim % t == 0:
            return t
        t -= align
    return dim


# --------------------------- fused QKV projection --------------------------- #

def _qkv_matmul_kernel(x_ref, w_ref, o_ref, acc_ref):
    # x block: (1, tm, tk), w block: (1, tk, tn), out block: (1, tm, tn)
    @pl.when(pl.program_id(3) == 0)
    def _init():
        acc_ref[...] = jnp.zeros(acc_ref.shape, acc_ref.dtype)

    # Matmul in the input dtype (bf16-native MXU when inputs are bf16),
    # f32 accumulation in VMEM scratch.
    acc_ref[...] += jnp.dot(x_ref[0], w_ref[0],
                            preferred_element_type=jnp.float32)

    @pl.when(pl.program_id(3) == pl.num_programs(3) - 1)
    def _finalize():
        o_ref[0] = acc_ref[...].astype(o_ref.dtype)


def _fused_qkv_projection(x_stacked, w_stacked, *, tm_target=256, tn_target=256,
                          tk_target=512):
    """x_stacked: (1 or 3, M, K); w_stacked: (3, K, N) (already transposed).

    Returns (3, M, N) = x_p @ w_p for p in {q, k, v}."""
    px, M, K = x_stacked.shape
    P, _, N = w_stacked.shape

    tm = _pick_tile(M, tm_target, 8)
    tn = _pick_tile(N, tn_target, 128)
    tk = _pick_tile(K, tk_target, 128)
    grid = (P, M // tm, N // tn, K // tk)

    if px == 1:
        x_index = lambda p, i, j, kk: (0, i, kk)      # shared activation (self-attn)
    else:
        x_index = lambda p, i, j, kk: (p, i, kk)

    return pl.pallas_call(
        _qkv_matmul_kernel,
        out_shape=jax.ShapeDtypeStruct((P, M, N), x_stacked.dtype),
        grid=grid,
        in_specs=[
            pl.BlockSpec((1, tm, tk), x_index),
            pl.BlockSpec((1, tk, tn), lambda p, i, j, kk: (p, kk, j)),
        ],
        out_specs=pl.BlockSpec((1, tm, tn), lambda p, i, j, kk: (p, i, j)),
        scratch_shapes=[pltpu.VMEM((tm, tn), jnp.float32)],
        compiler_params=pltpu.CompilerParams(
            dimension_semantics=("parallel", "parallel", "parallel", "arbitrary"),
            vmem_limit_bytes=_VMEM_LIMIT_BYTES,
        ),
    )(x_stacked, w_stacked)


# ------------------------- flash attention (fwd only) ----------------------- #

def _flash_attn_kernel(q_ref, k_ref, v_ref, o_ref, m_ref, l_ref, acc_ref, *, scale):
    # blocks: q (1, G, tq, D), k/v (1, G, tkv, D), out (1, G, tq, D)
    kv_idx = pl.program_id(3)

    @pl.when(kv_idx == 0)
    def _init():
        m_ref[...] = jnp.full(m_ref.shape, -jnp.inf, m_ref.dtype)
        l_ref[...] = jnp.zeros(l_ref.shape, l_ref.dtype)
        acc_ref[...] = jnp.zeros(acc_ref.shape, acc_ref.dtype)

    # Fold the softmax scale into q once per tile (G*tq*D mults instead of
    # G*tq*tkv on the scores); keep the matmul operands in their native dtype.
    q = q_ref[0] * scale            # (G, tq, D)
    k = k_ref[0]                    # (G, tkv, D)
    v = v_ref[0]                    # (G, tkv, D)

    # Q K^T batched over the head group; contraction over D handled by the MXU
    # (no explicit transpose of k), f32 accumulation.
    s = jnp.einsum("gqd,gkd->gqk", q, k,
                   preferred_element_type=jnp.float32)        # (G, tq, tkv)

    m_prev = m_ref[...]                                       # (G, tq, 1)
    m_new = jnp.maximum(m_prev, jnp.max(s, axis=-1, keepdims=True))
    alpha = jnp.exp(m_prev - m_new)
    p = jnp.exp(s - m_new)                                    # (G, tq, tkv) f32

    l_ref[...] = alpha * l_ref[...] + jnp.sum(p, axis=-1, keepdims=True)
    acc_ref[...] = alpha * acc_ref[...] + jnp.einsum(
        "gqk,gkd->gqd", p.astype(v.dtype), v,
        preferred_element_type=jnp.float32)
    m_ref[...] = m_new

    @pl.when(kv_idx == pl.num_programs(3) - 1)
    def _finalize():
        inv_l = pl.reciprocal(l_ref[...], approx=True)        # EUP slot, ~free
        o_ref[0] = (acc_ref[...] * inv_l).astype(o_ref.dtype)


def _flash_attention(qh, kh, vh, *, scale, tq_target=128, tkv_target=256,
                     head_group_target=4):
    """qh/kh/vh: (N, H, L, D) -> (N, H, L, D); non-causal, no mask, dropout=0."""
    N, H, L, D = qh.shape
    tq = _pick_tile(L, tq_target, 8)
    tkv = _pick_tile(L, tkv_target, 8)
    G = _pick_tile(H, head_group_target, 1)   # head axis is not a tiled block dim
    grid = (N, H // G, L // tq, L // tkv)     # kv-reduction axis last

    q_spec = pl.BlockSpec((1, G, tq, D), lambda b, g, qi, ki: (b, g, qi, 0))
    kv_spec = pl.BlockSpec((1, G, tkv, D), lambda b, g, qi, ki: (b, g, ki, 0))
    o_spec = pl.BlockSpec((1, G, tq, D), lambda b, g, qi, ki: (b, g, qi, 0))

    return pl.pallas_call(
        functools.partial(_flash_attn_kernel, scale=scale),
        out_shape=jax.ShapeDtypeStruct((N, H, L, D), qh.dtype),
        grid=grid,
        in_specs=[q_spec, kv_spec, kv_spec],
        out_specs=o_spec,
        scratch_shapes=[
            pltpu.VMEM((G, tq, 1), jnp.float32),   # running max
            pltpu.VMEM((G, tq, 1), jnp.float32),   # running denom
            pltpu.VMEM((G, tq, D), jnp.float32),   # output accumulator
        ],
        compiler_params=pltpu.CompilerParams(
            dimension_semantics=("parallel", "parallel", "parallel", "arbitrary"),
            vmem_limit_bytes=_VMEM_LIMIT_BYTES,
        ),
    )(qh, kh, vh)


# ------------------------------ module wrapper ------------------------------ #

def pack_qkv_weights(wq, wk, wv):
    """Pack torch-style (out, in) Linear weights once, outside the hot path.

    Returns (3, E, E) with each slice transposed so projection is x @ W."""
    return jnp.stack([wq.T, wk.T, wv.T], axis=0)


def multihead_attention_flash_v2(q, k, v, packed_w, n_head,
                                 softmax_scale=None, causal=False):
    """Forward pass of MultiheadAttentionFlashV2 (shift_group=None, dropout=0).

    q, k, v: (L, N, E).  packed_w: (3, E, E) from pack_qkv_weights.
    Returns a 1-tuple of (L, N, E)."""
    assert not causal, "causal path not exercised by this module's defaults"
    L, N, E = q.shape
    H = n_head
    D = E // H
    scale = float(softmax_scale) if softmax_scale is not None else 1.0 / math.sqrt(D)

    def flat(x):                         # module's permute(1, 0, 2), then flatten
        return jnp.transpose(x, (1, 0, 2)).reshape(N * L, E)

    if (q is k) and (k is v):            # self-attention: read activation once
        x_stacked = flat(q)[None]                                # (1, N*L, E)
    else:
        x_stacked = jnp.stack([flat(q), flat(k), flat(v)], 0)    # (3, N*L, E)

    y = _fused_qkv_projection(x_stacked, packed_w)               # (3, N*L, E)

    def heads(t):  # 'b n (h d) -> b h n d'
        return jnp.transpose(t.reshape(N, L, H, D), (0, 2, 1, 3))

    qh, kh, vh = heads(y[0]), heads(y[1]), heads(y[2])

    out = _flash_attention(qh, kh, vh, scale=scale)              # (N, H, L, D)

    out = jnp.transpose(out, (0, 2, 1, 3)).reshape(N, L, E)      # 'b h n d -> b n (h d)'
    return (jnp.transpose(out, (1, 0, 2)),)                      # back to (L, N, E)


# ----------------------------- pure-JAX reference --------------------------- #

def _reference(q, k, v, wq, wk, wv, n_head, softmax_scale=None):
    L, N, E = q.shape
    h = n_head
    d = E // h
    scale = softmax_scale if softmax_scale is not None else 1.0 / math.sqrt(d)

    def proj(x, w):
        xb = jnp.transpose(x, (1, 0, 2))
        y = jnp.einsum("nle,oe->nlo", xb, w)       # nn.Linear: x @ W.T
        return jnp.transpose(y.reshape(N, L, h, d), (0, 2, 1, 3))

    qh, kh, vh = proj(q, wq), proj(k, wk), proj(v, wv)
    s = jnp.einsum("nhqd,nhkd->nhqk", qh, kh) * scale
    p = jax.nn.softmax(s, axis=-1)
    o = jnp.einsum("nhqk,nhkd->nhqd", p, vh)
    o = jnp.transpose(o, (0, 2, 1, 3)).reshape(N, L, E)
    return jnp.transpose(o, (1, 0, 2))


# ----------------------------------- main ------------------------------------ #

if __name__ == "__main__":
    # Small shapes consistent with the module: seq=8, batch=2, embed=32, heads=4.
    L, N, E, H = 8, 2, 32, 4

    key = jax.random.PRNGKey(0)
    kq, kk_, kv_, kwq, kwk, kwv = jax.random.split(key, 6)

    q = jax.random.normal(kq, (L, N, E), dtype=jnp.float32)
    k = jax.random.normal(kk_, (L, N, E), dtype=jnp.float32)
    v = jax.random.normal(kv_, (L, N, E), dtype=jnp.float32)

    wq = 0.05 * jax.random.normal(kwq, (E, E), dtype=jnp.float32)
    wk = 0.05 * jax.random.normal(kwk, (E, E), dtype=jnp.float32)
    wv = 0.05 * jax.random.normal(kwv, (E, E), dtype=jnp.float32)

    packed = pack_qkv_weights(wq, wk, wv)   # done once, outside the hot path

    # Cross-attention style call (distinct q/k/v): stacked-activation path.
    (out,) = multihead_attention_flash_v2(q, k, v, packed, n_head=H)
    out = jax.block_until_ready(out)
    ref = jax.block_until_ready(_reference(q, k, v, wq, wk, wv, H))
    assert out.shape == (L, N, E), out.shape
    # approx reciprocal on the softmax denominator -> slightly looser tolerance
    assert jnp.allclose(out, ref, atol=5e-3, rtol=5e-3), float(jnp.max(jnp.abs(out - ref)))

    # Self-attention call (q is k is v): shared-activation fused-QKV path.
    (out_sa,) = multihead_attention_flash_v2(q, q, q, packed, n_head=H)
    out_sa = jax.block_until_ready(out_sa)
    ref_sa = jax.block_until_ready(_reference(q, q, q, wq, wk, wv, H))
    assert jnp.allclose(out_sa, ref_sa, atol=5e-3, rtol=5e-3), float(
        jnp.max(jnp.abs(out_sa - ref_sa)))

    print("KERNEL_OK")
</pallas_src>

<mosaic_0001>
module attributes {stable_mosaic.version = 11 : i64} {
  func.func @_qkv_matmul_kernel(%arg0: i32, %arg1: i32, %arg2: i32, %arg3: i32, %arg4: memref<1x16x32xf32, #tpu.memory_space<vmem>>, %arg5: memref<1x32x32xf32, #tpu.memory_space<vmem>>, %arg6: memref<1x16x32xf32, #tpu.memory_space<vmem>>, %arg7: memref<16x32xf32, #tpu.memory_space<vmem>>) attributes {dimension_semantics = [#tpu.dimension_semantics<parallel>, #tpu.dimension_semantics<parallel>, #tpu.dimension_semantics<parallel>, #tpu.dimension_semantics<arbitrary>], iteration_bounds = array<i64: 3, 1, 1, 1>, scalar_prefetch = 0 : i64, scratch_operands = 1 : i64, tpu.core_type = #tpu.core_type<tc>, window_params = [{transform_indices = @transform_0, window_bounds = array<i64: 1, 16, 32>}, {transform_indices = @transform_1, window_bounds = array<i64: 1, 32, 32>}, {transform_indices = @transform_2, window_bounds = array<i64: 1, 16, 32>}]} {
    %c0_i32 = arith.constant 0 : i32
    %0 = arith.cmpi eq, %arg3, %c0_i32 : i32
    %1 = arith.extui %0 : i1 to i32
    %c0_i32_0 = arith.constant 0 : i32
    %2 = arith.cmpi ne, %1, %c0_i32_0 : i32
    scf.if %2 {
      %cst_12 = arith.constant 0.000000e+00 : f32
      %14 = vector.broadcast %cst_12 : f32 to vector<16x32xf32>
      %c0_13 = arith.constant 0 : index
      %c0_14 = arith.constant 0 : index
      %15 = vector.load %arg7[%c0_13, %c0_14] : memref<16x32xf32, #tpu.memory_space<vmem>>, vector<16x32xf32>
      tpu.vector_store %arg7[%c0_13, %c0_14], %14 {strides = array<i32>} : memref<16x32xf32, #tpu.memory_space<vmem>>, vector<16x32xf32>,
    } else {
    }
    %c0 = arith.constant 0 : index
    %c0_1 = arith.constant 0 : index
    %3 = vector.load %arg7[%c0, %c0_1] : memref<16x32xf32, #tpu.memory_space<vmem>>, vector<16x32xf32>
    %c0_2 = arith.constant 0 : index
    %c0_3 = arith.constant 0 : index
    %c0_4 = arith.constant 0 : index
    %4 = vector.load %arg4[%c0_2, %c0_3, %c0_4] : memref<1x16x32xf32, #tpu.memory_space<vmem>>, vector<1x16x32xf32>
    %5 = vector.shape_cast %4 : vector<1x16x32xf32> to vector<16x32xf32>
    %c0_5 = arith.constant 0 : index
    %c0_6 = arith.constant 0 : index
    %c0_7 = arith.constant 0 : index
    %6 = vector.load %arg5[%c0_5, %c0_6, %c0_7] : memref<1x32x32xf32, #tpu.memory_space<vmem>>, vector<1x32x32xf32>
    %7 = vector.shape_cast %6 : vector<1x32x32xf32> to vector<32x32xf32>
    %cst = arith.constant dense<0.000000e+00> : vector<16x32xf32>
    %8 = tpu.matmul %5, %7, %cst {dimension_numbers = #tpu.dot_dimension_numbers<[1], [0], [0], [1], [0, 0, 1, 1], [], []>} : vector<16x32xf32>, vector<32x32xf32>, vector<16x32xf32> -> vector<16x32xf32>
    %9 = arith.addf %3, %8 : vector<16x32xf32>
    %c0_8 = arith.constant 0 : index
    %c0_9 = arith.constant 0 : index
    %10 = vector.load %arg7[%c0_8, %c0_9] : memref<16x32xf32, #tpu.memory_space<vmem>>, vector<16x32xf32>
    tpu.vector_store %arg7[%c0_8, %c0_9], %9 {strides = array<i32>} : memref<16x32xf32, #tpu.memory_space<vmem>>, vector<16x32xf32>,
    %c0_i32_10 = arith.constant 0 : i32
    %11 = arith.cmpi eq, %arg3, %c0_i32_10 : i32
    %12 = arith.extui %11 : i1 to i32
    %c0_i32_11 = arith.constant 0 : i32
    %13 = arith.cmpi ne, %12, %c0_i32_11 : i32
    scf.if %13 {
      %c0_12 = arith.constant 0 : index
      %c0_13 = arith.constant 0 : index
      %14 = vector.load %arg7[%c0_12, %c0_13] : memref<16x32xf32, #tpu.memory_space<vmem>>, vector<16x32xf32>
      %c0_14 = arith.constant 0 : index
      %c0_15 = arith.constant 0 : index
      %c0_16 = arith.constant 0 : index
      %15 = vector.load %arg6[%c0_14, %c0_15, %c0_16] : memref<1x16x32xf32, #tpu.memory_space<vmem>>, vector<1x16x32xf32>
      %16 = vector.shape_cast %15 : vector<1x16x32xf32> to vector<16x32xf32>
      %17 = vector.shape_cast %14 : vector<16x32xf32> to vector<1x16x32xf32>
      tpu.vector_store %arg6[%c0_14, %c0_15, %c0_16], %17 {strides = array<i32>} : memref<1x16x32xf32, #tpu.memory_space<vmem>>, vector<1x16x32xf32>,
    } else {
    }
    return
  }
  func.func @transform_0(%arg0: i32, %arg1: i32, %arg2: i32, %arg3: i32) -> (i32, i32, i32) {
    %c0_i32 = arith.constant 0 : i32
    return %arg0, %arg1, %arg3 : i32, i32, i32
  }
  func.func @transform_1(%arg0: i32, %arg1: i32, %arg2: i32, %arg3: i32) -> (i32, i32, i32) {
    %c0_i32 = arith.constant 0 : i32
    return %arg0, %arg3, %arg2 : i32, i32, i32
  }
  func.func @transform_2(%arg0: i32, %arg1: i32, %arg2: i32, %arg3: i32) -> (i32, i32, i32) {
    %c0_i32 = arith.constant 0 : i32
    return %arg0, %arg1, %arg2 : i32, i32, i32
  }
}

</mosaic_0001>

<llo_original>
// kernel: tpu_custom_call.1
$region0: #{tpu_custom_call.1}
  #allocation0 [shape = 'u32[]', space=smem, size = 0x4, offset = 0x4, fixed_abs, tag = 'smem constant byte address 0x4 - core index']
  #allocation1 [shape = 'u32[144,128]{1,0:T(1,128)}', space=vmem, size = 0x12000, scoped, tag = 'internal scratch']
  #allocation2 [shape = 'f32[16,32]{1,0:T(8,128)}', space=vmem, size = 0x2000, scoped, tag = 'scratch operand']
  %s0 = inlined_call_operand.hbm [shape: f32[3,16,32], index: 0, kind: input, shape index: {}]
  %s1 = inlined_call_operand.hbm [shape: f32[3,32,32], index: 1, kind: input, shape index: {}]
  %s2 = inlined_call_operand.hbm [shape: f32[3,16,32], index: 2, kind: output, shape index: {}]
  %s3 = sld [smem:[#allocation0]]
  $region57: #{tpu_custom_call.1} parent=0
    _
  %s5 = ssub.s32 1, %s3
  %s6 = scalar_select 0, %s5, %s3
  $region1: #{tpu_custom_call.1} parent=0
    #allocation3 [shape = 'u8[16384]{0}', space=vmem, size = 0x4000, scoped, tag = 'input window, operand 0']
    #allocation4 [shape = 's32[2]{0}', space=sflag, size = 0x8, scoped, tag = 'scoped memory for tpu_custom_call.1']
    #allocation5 [shape = 's32[2]{0}', space=sflag, size = 0x8, scoped, tag = 'scoped memory for tpu_custom_call.1']
    #allocation6 [shape = 'u8[32768]{0}', space=vmem, size = 0x8000, scoped, tag = 'input window, operand 1']
    #allocation7 [shape = 's32[2]{0}', space=sflag, size = 0x8, scoped, tag = 'scoped memory for tpu_custom_call.1']
    #allocation8 [shape = 'u8[16384]{0}', space=vmem, size = 0x4000, scoped, tag = 'output window, operand 0']
    %7 = vsyncpa [#allocation4], 0
    %s8 = scalar_lea.sflag [#allocation4], 1
    %9 = vsyncpa %s8, 0
    %10 = vsyncpa [#allocation7], 0
    %s11 = scalar_lea.sflag [#allocation7], 1
    %12 = vsyncpa %s11, 0
    %13 = vsyncpa [#allocation5], 0
    %s14 = scalar_lea.sflag [#allocation5], 1
    %15 = vsyncpa %s14, 0
    loop: start=0, step=1, limit=5
    $region2: #{tpu_custom_call.1} parent=1 // loop_pre_header
      _
    $region3: #{tpu_custom_call.1} parent=1 // loop_header
      %s17 = sphi 0, %s21
      %p18 = scmp.ge.s32.totalorder %s17, 5
      %s24 = sphi 0, %s50
      %s25 = sphi 0, %s46
      %s26 = sphi 0, %s42
      %s27 = sphi 0, %s38
      %s28 = sphi 0, %s24
      %s29 = sphi 0, %s25
      %s30 = sphi 0, %s26
      %s31 = sphi 0, %s27
      %s32 = sphi 0, %s28
      %s33 = sphi 0, %s29
      %s34 = sphi 0, %s30
      %s35 = sphi 0, %s31
      %s57 = sphi 0, %s59
      %s60 = sphi 0, %s57
      %s61 = sphi 0, %s60
      %s77 = sphi 0, %s61
      %s87 = sphi 0, %s89
      %s90 = sphi 0, %s87
      %s91 = sphi 0, %s90
      %s107 = sphi 0, %s91
      %s117 = sphi 0, %s119
      %s120 = sphi 0, %s117
      %s121 = sphi 0, %s120
      %s137 = sphi 0, %s121
    $region4: #{tpu_custom_call.1} parent=1 // loop_header_branch
      %20 = sbr.rel (%p18) target = $region8
    $region5: #{tpu_custom_call.1} parent=1 // loop_body
      %s22 = ssub.s32 %s17, 1
      %s23 = ssub.s32 %s17, 2
      %s36 = sadd.s32 1, %s27
      %p37 = scmp.ge.s32.totalorder %s36, 1
      %s38 = scalar_select %p37, 0, %s36
      %s39 = sadd.s32 1, %s26
      %s40 = scalar_select %p37, %s39, %s26
      %p41 = scmp.ge.s32.totalorder %s40, 1
      %s42 = scalar_select %p41, 0, %s40
      %s43 = sadd.s32 1, %s25
      %s44 = scalar_select %p41, %s43, %s25
      %p45 = scmp.ge.s32.totalorder %s44, 1
      %s46 = scalar_select %p45, 0, %s44
      %s47 = sadd.s32 1, %s24
      %s48 = scalar_select %p45, %s47, %s24
      %p49 = scmp.ge.s32.totalorder %s48, 3
      %s50 = scalar_select %p49, 0, %s48
      %s51 = ssub.s32 %s24, %s50
      %s52 = ssub.s32 %s25, %s46
      %s53 = sor.u32 %s51, %s52
      %s54 = ssub.s32 %s27, %s38
      %s55 = sor.u32 %s53, %s54
      %p56 = scmp.eq.s32.totalorder %s55, 0
      %s58 = sadd.s32 %s57, 1
      %s59 = scalar_select %p56, %s57, %s58
      %p62 = pneg %p56
      %p63 = scmp.eq.s32.totalorder %s17, 2
      %p64 = por %p62, %p63
      %p65 = scmp.ne.s32.totalorder %s57, %s60
      %p66 = scmp.eq.s32.totalorder %s17, 0
      %p67 = por %p65, %p66
      %p68 = scmp.ne.s32.totalorder %s57, %s60
      %p69 = scmp.eq.s32.totalorder %s22, 2
      %p70 = por %p68, %p69
      %p71 = scmp.ne.s32.totalorder %s60, %s61
      %p72 = scmp.eq.s32.totalorder %s22, 0
      %p73 = por %p71, %p72
      %p74 = scmp.ne.s32.totalorder %s60, %s61
      %p75 = scmp.eq.s32.totalorder %s23, 2
      %p76 = por %p74, %p75
      %p78 = scmp.ne.s32.totalorder %s61, %s77
      %p79 = scmp.eq.s32.totalorder %s23, 0
      %p80 = por %p78, %p79
      %s81 = ssub.s32 %s24, %s50
      %s82 = ssub.s32 %s27, %s38
      %s83 = sor.u32 %s81, %s82
      %s84 = ssub.s32 %s26, %s42
      %s85 = sor.u32 %s83, %s84
      %p86 = scmp.eq.s32.totalorder %s85, 0
      %s88 = sadd.s32 %s87, 1
      %s89 = scalar_select %p86, %s87, %s88
      %p92 = pneg %p86
      %p93 = scmp.eq.s32.totalorder %s17, 2
      %p94 = por %p92, %p93
      %p95 = scmp.ne.s32.totalorder %s87, %s90
      %p96 = scmp.eq.s32.totalorder %s17, 0
      %p97 = por %p95, %p96
      %p98 = scmp.ne.s32.totalorder %s87, %s90
      %p99 = scmp.eq.s32.totalorder %s22, 2
      %p100 = por %p98, %p99
      %p101 = scmp.ne.s32.totalorder %s90, %s91
      %p102 = scmp.eq.s32.totalorder %s22, 0
      %p103 = por %p101, %p102
      %p104 = scmp.ne.s32.totalorder %s90, %s91
      %p105 = scmp.eq.s32.totalorder %s23, 2
      %p106 = por %p104, %p105
      %p108 = scmp.ne.s32.totalorder %s91, %s107
      %p109 = scmp.eq.s32.totalorder %s23, 0
      %p110 = por %p108, %p109
      %s111 = ssub.s32 %s24, %s50
      %s112 = ssub.s32 %s25, %s46
      %s113 = sor.u32 %s111, %s112
      %s114 = ssub.s32 %s26, %s42
      %s115 = sor.u32 %s113, %s114
      %p116 = scmp.eq.s32.totalorder %s115, 0
      %s118 = sadd.s32 %s117, 1
      %s119 = scalar_select %p116, %s117, %s118
      %p122 = pneg %p116
      %p123 = scmp.eq.s32.totalorder %s17, 2
      %p124 = por %p122, %p123
      %p125 = scmp.ne.s32.totalorder %s117, %s120
      %p126 = scmp.eq.s32.totalorder %s17, 0
      %p127 = por %p125, %p126
      %p128 = scmp.ne.s32.totalorder %s117, %s120
      %p129 = scmp.eq.s32.totalorder %s22, 2
      %p130 = por %p128, %p129
      %p131 = scmp.ne.s32.totalorder %s120, %s121
      %p132 = scmp.eq.s32.totalorder %s22, 0
      %p133 = por %p131, %p132
      %p134 = scmp.ne.s32.totalorder %s120, %s121
      %p135 = scmp.eq.s32.totalorder %s23, 2
      %p136 = por %p134, %p135
      %p138 = scmp.ne.s32.totalorder %s121, %s137
      %p139 = scmp.eq.s32.totalorder %s23, 0
      %p140 = por %p138, %p139
      %p141 = scmp.le.s32.totalorder 1, %s17
      %p142 = scmp.lt.s32.totalorder %s17, 4
      %p143 = pnand %p141, %p142
      %p144 = pneg %p143
      // Predicated region
      $region9: #{tpu_custom_call.1} parent=5 // pred_check
        _
      $region10: #{tpu_custom_call.1} parent=5 // pred_check_branch
        %146 = sbr.rel (%p143) target = $region12
      $region11: #{tpu_custom_call.1} parent=5 // pred_region
        %s147 = ssub.s32 %s17, 1
      $region12: #{tpu_custom_call.1} parent=5 // pred_fallthru
        _
      %p148 = scmp.lt.s32.totalorder %s17, 3
      // Predicated region
      $region13: #{tpu_custom_call.1} parent=5 // pred_check
        %p149 = pneg %p148
      $region14: #{tpu_custom_call.1} parent=5 // pred_check_branch
        %151 = sbr.rel (%p149) target = $region16
      $region15: #{tpu_custom_call.1} parent=5 // pred_region
        // Predicated region
        $region17: #{tpu_custom_call.1} parent=15 // pred_check
          %p152 = pneg %p67
        $region18: #{tpu_custom_call.1} parent=15 // pred_check_branch
          %154 = sbr.rel (%p152) target = $region20
        $region19: #{tpu_custom_call.1} parent=15 // pred_region
          %s155 = sand.u32 %s57, 1
          %s156 = scalar_lea.sflag [#allocation4], %s155
          %s157 = sand.u32 %s57, 1
          %s158 = smul.addr %s157, 16
          %s159 = scalar_lea.vmem [#allocation3], %s158
          %s160 = smul.u32 2, %s25
          %s162 = ssub.s32 256, 256
          %163 = vsyncadd %s156, %s162
          %s164 = sadd.s32 %s27, %s160
          %s165 = smul.addr %s24, 2
          %s166 = sadd.s32 %s164, %s165
          %s167 = smul.addr %s166, 128
          %s168 = scalar_lea.hbm %s0, %s167
          %s169 = sshll.u32 %s159, 4
          %s170 = int_to_ptr.vmem [resolvable:$true] %s169
          %175 = dma.hbm_to_vmem [thread:$0]  %s168, 256, %s170, %s156, 128, 128, 8
        $region20: #{tpu_custom_call.1} parent=15 // pred_fallthru
          _
        // Predicated region
        $region21: #{tpu_custom_call.1} parent=15 // pred_check
          %p176 = pneg %p97
        $region22: #{tpu_custom_call.1} parent=15 // pred_check_branch
          %178 = sbr.rel (%p176) target = $region24
        $region23: #{tpu_custom_call.1} parent=15 // pred_region
          %s179 = sand.u32 %s87, 1
          %s180 = scalar_lea.sflag [#allocation7], %s179
          %s181 = sand.u32 %s87, 1
          %s182 = smul.addr %s181, 32
          %s183 = scalar_lea.vmem [#allocation6], %s182
          %s184 = smul.u32 4, %s27
          %s186 = ssub.s32 512, 512
          %187 = vsyncadd %s180, %s186
          %s188 = sadd.s32 %s26, %s184
          %s189 = smul.addr %s24, 4
          %s190 = sadd.s32 %s188, %s189
          %s191 = smul.addr %s190, 128
          %s192 = scalar_lea.hbm %s1, %s191
          %s193 = sshll.u32 %s183, 4
          %s194 = int_to_ptr.vmem [resolvable:$true] %s193
          %199 = dma.hbm_to_vmem [thread:$0]  %s192, 512, %s194, %s180, 128, 128, 8
        $region24: #{tpu_custom_call.1} parent=15 // pred_fallthru
          _
      $region16: #{tpu_custom_call.1} parent=5 // pred_fallthru
        _
      %p200 = scmp.le.s32.totalorder 1, %s17
      %p201 = scmp.lt.s32.totalorder %s17, 4
      %p202 = pnand %p200, %p201
      %p203 = pneg %p202
      // Predicated region
      $region25: #{tpu_custom_call.1} parent=5 // pred_check
        _
      $region26: #{tpu_custom_call.1} parent=5 // pred_check_branch
        %205 = sbr.rel (%p202) target = $region28
      $region27: #{tpu_custom_call.1} parent=5 // pred_region
        %s206 = ssub.s32 %s17, 1
        %s207 = sand.u32 %s60, 1
        %s208 = scalar_lea.sflag [#allocation4], %s207
        %s209 = sand.u32 %s60, 1
        %s210 = smul.addr %s209, 16
        %s211 = scalar_lea.vmem [#allocation3], %s210
        // Predicated region
        $region29: #{tpu_custom_call.1} parent=27 // pred_check
          %p212 = pneg %p73
        $region30: #{tpu_custom_call.1} parent=27 // pred_check_branch
          %214 = sbr.rel (%p212) target = $region32
        $region31: #{tpu_custom_call.1} parent=27 // pred_region
          %215 = dma.done %s208, 256
        $region32: #{tpu_custom_call.1} parent=27 // pred_fallthru
          _
        %s216 = sand.u32 %s90, 1
        %s217 = scalar_lea.sflag [#allocation7], %s216
        %s218 = sand.u32 %s90, 1
        %s219 = smul.addr %s218, 32
        %s220 = scalar_lea.vmem [#allocation6], %s219
        // Predicated region
        $region33: #{tpu_custom_call.1} parent=27 // pred_check
          %p221 = pneg %p103
        $region34: #{tpu_custom_call.1} parent=27 // pred_check_branch
          %223 = sbr.rel (%p221) target = $region36
        $region35: #{tpu_custom_call.1} parent=27 // pred_region
          %224 = dma.done %s217, 512
        $region36: #{tpu_custom_call.1} parent=27 // pred_fallthru
          _
        %s225 = sand.u32 %s60, 1
        %s226 = scalar_lea.sflag [#allocation4], %s225
        %s227 = sand.u32 %s60, 1
        %s228 = smul.addr %s227, 16
        %s229 = scalar_lea.vmem [#allocation3], %s228
        %p230 = pneg %p73
        %p231 = pneg %p70
        %s232 = sand.u32 %s90, 1
        %s233 = scalar_lea.sflag [#allocation7], %s232
        %s234 = sand.u32 %s90, 1
        %s235 = smul.addr %s234, 32
        %s236 = scalar_lea.vmem [#allocation6], %s235
        %p237 = pneg %p103
        %p238 = pneg %p100
        %p239 = pneg %p133
        %p240 = pneg %p130
        %s241 = sand.u32 %s120, 1
        %s242 = scalar_lea.sflag [#allocation5], %s241
        %s243 = sand.u32 %s120, 1
        %s244 = smul.addr %s243, 16
        %s245 = scalar_lea.vmem [#allocation8], %s244
        %s246 = smul.u32 2, %s29
        %s247 = smul.u32 4, %s31
        %s248 = smul.u32 2, %s29
        %p249 = scmp.eq.s32.totalorder %s31, 0
        // Predicated region
        $region37: #{tpu_custom_call.1} parent=27 // pred_check
          %p250 = pneg %p249
        $region38: #{tpu_custom_call.1} parent=27 // pred_check_branch
          %252 = sbr.rel (%p250) target = $region40
        $region39: #{tpu_custom_call.1} parent=27 // pred_region
          %vm253 = vcmask 261120
          %254 = vst.msk [vmem:[#allocation2] sm:$0xff] %vm253, 0.0
          %255 = vst.msk [vmem:[#allocation2 + $0x8] sm:$0xff] %vm253, 0.0
        $region40: #{tpu_custom_call.1} parent=27 // pred_fallthru
          _
        %v256 = vld [vmem:[#allocation2] sm:$0xff]
        %v257 = vld [vmem:[#allocation2 + $0x8] sm:$0xff]
        %v258 = vld [vmem:[%s211] sm:$0xff]
        %v259 = vld [vmem:[%s211 + $0x8] sm:$0xff]
        %v260 = vld [vmem:[%s220] sm:$0xff]
        %v261 = vld [vmem:[%s220 + $0x8] sm:$0xff]
        %v262 = vld [vmem:[%s220 + $0x10] sm:$0xff]
        %v263 = vld [vmem:[%s220 + $0x18] sm:$0xff]
        %vm264 = vcmask 261120
        %v266 = vsel %vm264, %v258, 0
        %v269 = vsel %vm264, %v259, 0
        %271 = vmatprep.subr.mxu0 0.0
        %272 = vmatpush1.msra.mxu0 %v260
        %273 = vmatprep.subr.mxu0 0.0
        %274 = vmatpush1.msra.mxu0 %v261
        %275 = vmatprep.subr.mxu0 0.0
        %276 = vmatpush1.msra.mxu0 %v262
        %277 = vmatprep.subr.mxu0 0.0
        %278 = vmatpush1.msra.mxu0 %v263
        %279 = vmatprep.subr.mxu0 0.0
        %280 = vmatpush1.msra.mxu0 0.0
        %281 = vmatprep.subr.mxu0 0.0
        %282 = vmatpush1.msra.mxu0 0.0
        %283 = vmatprep.subr.mxu0 0.0
        %284 = vmatpush1.msra.mxu0 0.0
        %285 = vmatprep.subr.mxu0 0.0
        %286 = vmatpush1.msra.mxu0 0.0
        %287 = vmatprep.subr.mxu0 0.0
        %288 = vmatpush1.msra.mxu0 0.0
        %289 = vmatprep.subr.mxu0 0.0
        %290 = vmatpush1.msra.mxu0 0.0
        %291 = vmatprep.subr.mxu0 0.0
        %292 = vmatpush1.msra.mxu0 0.0
        %293 = vmatprep.subr.mxu0 0.0
        %294 = vmatpush1.msra.mxu0 0.0
        %295 = vmatprep.subr.mxu0 0.0
        %296 = vmatpush1.msra.mxu0 0.0
        %297 = vmatprep.subr.mxu0 0.0
        %298 = vmatpush1.msra.mxu0 0.0
        %299 = vmatprep.subr.mxu0 0.0
        %300 = vmatpush1.msra.mxu0 0.0
        %301 = vmatprep.subr.mxu0 0.0
        %302 = vmatpush1.msra.mxu0 0.0
        %303 = vmatprep.subr.mxu0 0.0
        %304 = vmatpush1.msra.mxu0 0.0
        %305 = vmatprep.subr.mxu0 0.0
        %306 = vmatpush1.msra.mxu0 0.0
        %307 = vmatprep.subr.mxu0 0.0
        %308 = vmatpush1.msra.mxu0 0.0
        %309 = vmatprep.subr.mxu0 0.0
        %310 = vmatpush1.msra.mxu0 0.0
        %311 = vmatprep.subr.mxu0 0.0
        %312 = vmatpush1.msra.mxu0 0.0
        %313 = vmatprep.subr.mxu0 0.0
        %314 = vmatpush1.msra.mxu0 0.0
        %315 = vmatprep.subr.mxu0 0.0
        %316 = vmatpush1.msra.mxu0 0.0
        %317 = vmatprep.subr.mxu0 0.0
        %318 = vmatpush1.msra.mxu0 0.0
        %319 = vmatprep.subr.mxu0 0.0
        %320 = vmatpush1.msra.mxu0 0.0
        %321 = vmatprep.subr.mxu0 0.0
        %322 = vmatpush1.msra.mxu0 0.0
        %323 = vmatprep.subr.mxu0 0.0
        %324 = vmatpush1.msra.mxu0 0.0
        %325 = vmatprep.subr.mxu0 0.0
        %326 = vmatpush1.msra.mxu0 0.0
        %327 = vmatprep.subr.mxu0 0.0
        %328 = vmatpush1.msra.mxu0 0.0
        %329 = vmatprep.subr.mxu0 0.0
        %330 = vmatpush1.msra.mxu0 0.0
        %331 = vmatprep.subr.mxu0 0.0
        %332 = vmatpush1.msra.mxu0 0.0
        %333 = vmatprep.subr.mxu0 0.0
        %334 = vmatpush1.msra.mxu0 0.0
        %335 = vmatprep.mubr.f32.mxu0 0.0
        %336 = vmatmul.mubr.f32.gmra.mrb[0].mxu0 %v266
        %v337 = vpop.f32.mrb[0].mxu0
        %v338 = vadd.f32 0.0, %v337
        %v339 = vpop.f32.mrb[0].mxu0
        %340 = vmatprep.mubr.f32.mxu0 0.0
        %341 = vmatmul.mubr.f32.gmra.mrb[0].mxu0 %v269
        %v342 = vpop.f32.mrb[0].mxu0
        %v343 = vadd.f32 0.0, %v342
        %v344 = vpop.f32.mrb[0].mxu0
        %345 = vdwg.mxu0
        %v346 = vadd.f32 %v256, %v338
        %v347 = vadd.f32 %v257, %v343
        %348 = vst.msk [vmem:[#allocation2] sm:$0xff] %vm264, %v346
        %349 = vst.msk [vmem:[#allocation2 + $0x8] sm:$0xff] %vm264, %v347
        // Predicated region
        $region41: #{tpu_custom_call.1} parent=27 // pred_check
          %p350 = pneg %p249
        $region42: #{tpu_custom_call.1} parent=27 // pred_check_branch
          %352 = sbr.rel (%p350) target = $region44
        $region43: #{tpu_custom_call.1} parent=27 // pred_region
          %v353 = vld [vmem:[#allocation2] sm:$0xff]
          %v354 = vld [vmem:[#allocation2 + $0x8] sm:$0xff]
          %355 = vst.msk [vmem:[%s245] sm:$0xff] %vm264, %v353
          %356 = vst.msk [vmem:[%s245 + $0x8] sm:$0xff] %vm264, %v354
        $region44: #{tpu_custom_call.1} parent=27 // pred_fallthru
          _
        %s357 = sand.u32 %s120, 1
        %s358 = scalar_lea.sflag [#allocation5], %s357
        %s359 = sand.u32 %s120, 1
        %s360 = smul.addr %s359, 16
        %s361 = scalar_lea.vmem [#allocation8], %s360
        // Predicated region
        $region45: #{tpu_custom_call.1} parent=27 // pred_check
          %p362 = pneg %p130
        $region46: #{tpu_custom_call.1} parent=27 // pred_check_branch
          %364 = sbr.rel (%p362) target = $region48
        $region47: #{tpu_custom_call.1} parent=27 // pred_region
          %s365 = smul.u32 2, %s29
          %s367 = ssub.s32 256, 256
          %368 = vsyncadd %s358, %s367
          %s369 = sadd.s32 %s30, %s365
          %s370 = smul.addr %s28, 2
          %s371 = sadd.s32 %s369, %s370
          %s372 = smul.addr %s371, 128
          %s373 = scalar_lea.hbm %s2, %s372
          %s374 = sshll.u32 %s361, 4
          %s375 = int_to_ptr.vmem [resolvable:$true] %s374
          %380 = dma.vmem_to_hbm [thread:$0]  %s375, 256, %s373, %s358, 128, 128, 8
        $region48: #{tpu_custom_call.1} parent=27 // pred_fallthru
          _
      $region28: #{tpu_custom_call.1} parent=5 // pred_fallthru
        _
      %p381 = scmp.le.s32.totalorder 2, %s17
      // Predicated region
      $region49: #{tpu_custom_call.1} parent=5 // pred_check
        %p382 = pneg %p381
      $region50: #{tpu_custom_call.1} parent=5 // pred_check_branch
        %384 = sbr.rel (%p382) target = $region52
      $region51: #{tpu_custom_call.1} parent=5 // pred_region
        %s385 = ssub.s32 %s17, 2
        // Predicated region
        $region53: #{tpu_custom_call.1} parent=51 // pred_check
          %p386 = pneg %p136
        $region54: #{tpu_custom_call.1} parent=51 // pred_check_branch
          %388 = sbr.rel (%p386) target = $region56
        $region55: #{tpu_custom_call.1} parent=51 // pred_region
          %s389 = sand.u32 %s121, 1
          %s390 = scalar_lea.sflag [#allocation5], %s389
          %s391 = sand.u32 %s121, 1
          %s392 = smul.addr %s391, 16
          %s393 = scalar_lea.vmem [#allocation8], %s392
          %394 = dma.done %s390, 256
        $region56: #{tpu_custom_call.1} parent=51 // pred_fallthru
          _
      $region52: #{tpu_custom_call.1} parent=5 // pred_fallthru
        _
    $region6: #{tpu_custom_call.1} parent=1 // loop_footer
      %s21 = sadd.s32 1, %s17
    $region7: #{tpu_custom_call.1} parent=1 // loop_footer_branch
      %16 = sbr.rel target = $region3
    $region8: #{tpu_custom_call.1} parent=1 // loop_exit
      _
    %395 = vsyncpa [#allocation4], 1
    %s396 = scalar_lea.sflag [#allocation4], 1
    %397 = vsyncpa %s396, 1
    %398 = vsyncpa [#allocation7], 1
    %s399 = scalar_lea.sflag [#allocation7], 1
    %400 = vsyncpa %s399, 1
    %401 = vsyncpa [#allocation5], 1
    %s402 = scalar_lea.sflag [#allocation5], 1
    %403 = vsyncpa %s402, 1

</llo_original>
